<compile_context>
chip_gen: v5e
topology: v5e:2x2
jax: 0.10.0
libtpu: 0.0.40
codegen_flags: <defaults>
</compile_context>

<pallas_src>
import functools
import math

import jax
import jax.numpy as jnp
from jax.experimental import pallas as pl
from jax.experimental.pallas import tpu as pltpu


def _round_up(x, m):
    return (x + m - 1) // m * m


# --------------------------------------------------------------------------------------
# Kernels
# --------------------------------------------------------------------------------------
def _qlinear_block_kernel(qw_ref, s_ref, sz_ref, bias_ref, x_ref, o_ref,
                          acc_ref, w_ref, *, group_size, gpk):
    """General / prefill path.

    qw_ref  : (TKh, TN)     uint8  packed nibbles, 'within-group halves' layout
    s_ref   : (1, gpk, TN)  f32    per-group scale            (lane-dense rows)
    sz_ref  : (1, gpk, TN)  f32    per-group scale*zero
    bias_ref: (1, TN)       f32
    x_ref   : (TM, 2*TKh)   bf16   contiguous activation columns of this K block
    acc_ref : (TM, TN)      f32    VMEM accumulator, resident across the K grid axis
    w_ref   : (2*TKh, TN)   bf16   dequantized-weight staging scratch
    """
    gsh = group_size // 2
    k = pl.program_id(2)

    @pl.when(k == 0)
    def _():
        acc_ref[...] = jnp.zeros_like(acc_ref)

    s_all = s_ref[0]           # (gpk, TN)
    sz_all = sz_ref[0]

    # Dequantize the whole packed K block into the bf16 scratch, rows ordered to match
    # the contiguous x columns of this block.
    for g in range(gpk):       # static unroll; each group is a (gsh, TN) stripe
        qg = qw_ref[g * gsh:(g + 1) * gsh, :].astype(jnp.int32)
        s_row = s_all[g:g + 1, :]
        sz_row = sz_all[g:g + 1, :]
        # w = (q - z) * s  ==  q*s - (s*z); zero point folded offline into sz.
        w_ref[g * group_size:g * group_size + gsh, :] = (
            (qg & 0xF).astype(jnp.float32) * s_row - sz_row).astype(jnp.bfloat16)
        w_ref[g * group_size + gsh:(g + 1) * group_size, :] = (
            (qg >> 4).astype(jnp.float32) * s_row - sz_row).astype(jnp.bfloat16)

    # One MXU contraction (depth 2*TKh) and one accumulator RMW per K block.
    acc_ref[...] += jnp.dot(x_ref[...], w_ref[...],
                            preferred_element_type=jnp.float32)

    @pl.when(k == pl.num_programs(2) - 1)
    def _():
        o_ref[...] = (acc_ref[...] + bias_ref[...]).astype(o_ref.dtype)


def _qlinear_decode_kernel(qw_ref, s_ref, sz_ref, bias_ref, x_ref, o_ref,
                           acc_ref, *, group_size, gpk):
    """Small-M / decode path: matmul the raw nibbles (exact in bf16), apply the group
    scale to the (TM, TN) partial product and subtract rowsum(x_g)*(scale*zero) as a
    rank-1 zero-point correction — no per-element dequant multiply/subtract."""
    gsh = group_size // 2
    k = pl.program_id(2)

    @pl.when(k == 0)
    def _():
        acc_ref[...] = jnp.zeros_like(acc_ref)

    s_all = s_ref[0]           # (gpk, TN)
    sz_all = sz_ref[0]
    x = x_ref[...]             # (TM, 2*TKh) bf16

    for g in range(gpk):
        qg = qw_ref[g * gsh:(g + 1) * gsh, :].astype(jnp.int32)
        q_lo = (qg & 0xF).astype(jnp.float32).astype(jnp.bfloat16)    # exact (0..15)
        q_hi = (qg >> 4).astype(jnp.float32).astype(jnp.bfloat16)
        x_g = x[:, g * group_size:(g + 1) * group_size]               # (TM, gs)
        p = jnp.dot(x_g[:, :gsh], q_lo, preferred_element_type=jnp.float32)
        p = p + jnp.dot(x_g[:, gsh:], q_hi, preferred_element_type=jnp.float32)
        rs = jnp.sum(x_g.astype(jnp.float32), axis=1, keepdims=True)  # (TM, 1)
        acc_ref[...] += p * s_all[g:g + 1, :] - rs * sz_all[g:g + 1, :]

    @pl.when(k == pl.num_programs(2) - 1)
    def _():
        o_ref[...] = (acc_ref[...] + bias_ref[...]).astype(o_ref.dtype)


# --------------------------------------------------------------------------------------
# Wrapper
# --------------------------------------------------------------------------------------
@functools.partial(jax.jit, static_argnames=("bits", "group_size", "block_m", "block_n",
                                             "block_k", "out_dtype"))
def quantized_linear(x, qweight_kernel, scale, zero, bias=None, *, bits=4,
                     group_size=128, block_m=None, block_n=None, block_k=None,
                     out_dtype=None):
    """Forward pass.  qweight_kernel is the kernel-ready (K/2, N) packing produced once
    offline by repack_for_kernel()."""
    assert bits == 4, "only 4-bit packing implemented"
    *lead, K = x.shape
    Kh, N = qweight_kernel.shape
    assert 2 * Kh == K, (Kh, K)
    gs = group_size
    gsh = gs // 2
    assert gs % 32 == 0 and K % gs == 0 and N % 128 == 0, (K, N, gs)
    n_groups = K // gs
    out_dtype = x.dtype if out_dtype is None else out_dtype

    x2 = x.reshape(-1, K)
    M = x2.shape[0]

    # ---- tile selection ---------------------------------------------------------------
    # Packed-K tile: whole quant groups per block, lane/sublane aligned.
    q_step = (gsh * 64) // math.gcd(gsh, 64)                # lcm(gs/2, 64)
    tkh = min((block_k // 2) if block_k is not None else 1024, Kh)
    tkh = (tkh // q_step) * q_step
    while tkh > 0 and Kh % tkh != 0:
        tkh -= q_step
    if tkh <= 0:
        tkh = Kh                                            # full-K fallback (block==dims)
    num_kb = Kh // tkh
    gpk = (2 * tkh) // gs                                   # quant groups per K block

    if block_n is not None:
        tn = block_n
    else:
        tn = 512 if N % 512 == 0 else (256 if N % 256 == 0 else 128)
    assert N % tn == 0 and tn % 128 == 0, (N, tn)

    if block_m is not None:
        tm = block_m
    elif M <= 512:
        tm = _round_up(M, 16)
    else:
        tm = 512
    M_pad = _round_up(M, tm)

    # Keep >= 2 tiles on the parallel grid axes so both v7x TensorCores get work.
    while (M_pad // tm) * (N // tn) < 2 and tn > 128 and N % (tn // 2) == 0:
        tn //= 2

    use_decode = M_pad <= 32                                # decode regime

    # ---- tiny parameter-setup glue ------------------------------------------------------
    xb = x2.astype(jnp.bfloat16)                            # bf16 MXU operand
    if M_pad != M:
        xb = jnp.pad(xb, ((0, M_pad - M), (0, 0)))

    scale_t = scale.astype(jnp.float32).T                   # (n_groups, N) lane-dense
    sz_t = (scale.astype(jnp.float32) * zero.astype(jnp.float32)).T
    scale_b = scale_t.reshape(num_kb, gpk, N)
    sz_b = sz_t.reshape(num_kb, gpk, N)

    if bias is None:
        bias2 = jnp.zeros((1, N), jnp.float32)
    else:
        bias2 = bias.astype(jnp.float32).reshape(1, N)

    grid = (M_pad // tm, N // tn, num_kb)
    in_specs = [
        pl.BlockSpec((tkh, tn), lambda i, j, k: (k, j)),          # packed weights (Kh, N)
        pl.BlockSpec((1, gpk, tn), lambda i, j, k: (k, 0, j)),    # group scale
        pl.BlockSpec((1, gpk, tn), lambda i, j, k: (k, 0, j)),    # group scale*zero
        pl.BlockSpec((1, tn), lambda i, j, k: (0, j)),            # bias
        pl.BlockSpec((tm, 2 * tkh), lambda i, j, k: (i, k)),      # x (contiguous K block)
    ]
    scratch = [pltpu.VMEM((tm, tn), jnp.float32)]                 # accumulator
    if use_decode:
        kernel = functools.partial(_qlinear_decode_kernel, group_size=gs, gpk=gpk)
    else:
        scratch.append(pltpu.VMEM((2 * tkh, tn), jnp.bfloat16))   # dequant staging
        kernel = functools.partial(_qlinear_block_kernel, group_size=gs, gpk=gpk)

    out = pl.pallas_call(
        kernel,
        out_shape=jax.ShapeDtypeStruct((M_pad, N), out_dtype),
        grid=grid,
        in_specs=in_specs,
        out_specs=pl.BlockSpec((tm, tn), lambda i, j, k: (i, j)),
        scratch_shapes=scratch,
        compiler_params=pltpu.CompilerParams(
            dimension_semantics=("parallel", "parallel", "arbitrary")),
    )(qweight_kernel, scale_b, sz_b, bias2, xb)

    if M_pad != M:
        out = out[:M]
    return out.reshape(*lead, N)


# --------------------------------------------------------------------------------------
# Offline repack + plain-JAX reference
# --------------------------------------------------------------------------------------
def unpack_interleaved(qweight, bits=4):
    """Module storage convention: byte j holds column 2j (low nibble), 2j+1 (high)."""
    assert bits == 4
    q = qweight.astype(jnp.int32)
    N = q.shape[0]
    return jnp.stack([q & 0xF, q >> 4], axis=-1).reshape(N, -1)    # (N, K)


def repack_for_kernel(qweight, bits=4, group_size=128):
    """One-time offline preprocessing: (N, K/2) interleaved bytes -> (K/2, N)
    'within-group halves' bytes (see header)."""
    assert bits == 4
    unpacked = unpack_interleaved(qweight, bits)                   # (N, K) int32 0..15
    N, K = unpacked.shape
    gs, gsh = group_size, group_size // 2
    u = unpacked.reshape(N, K // gs, 2, gsh)
    packed = (u[:, :, 0, :] | (u[:, :, 1, :] << 4)).astype(jnp.uint8)   # (N, K//gs, gsh)
    return jnp.transpose(packed.reshape(N, K // 2), (1, 0))        # (K/2, N)


def reference_forward(x, qweight, scale, zero, bias, bits, group_size):
    """Plain-JAX f32 reference on the module storage convention."""
    unpacked = unpack_interleaved(qweight, bits).astype(jnp.float32)    # (N, K)
    scale_e = jnp.repeat(scale, group_size, axis=1)
    zero_e = jnp.repeat(zero, group_size, axis=1)
    w = (unpacked - zero_e) * scale_e
    y = jnp.einsum("...k,nk->...n", x.astype(jnp.float32), w)
    if bias is not None:
        y = y + bias
    return y


if __name__ == "__main__":
    # QuantizedLinear(in_features=1024, out_features=256, bias=True, bits=4, group_size=128)
    in_features, out_features = 1024, 256
    bits, group_size = 4, 128

    key = jax.random.PRNGKey(0)
    k_qw, k_s, k_z, k_b, k_x1, k_x2 = jax.random.split(key, 6)

    qweight = jax.random.randint(
        k_qw, (out_features, in_features * bits // 8), 0, 256, dtype=jnp.int32
    ).astype(jnp.uint8)
    n_groups = in_features // group_size
    scale = 0.01 + 0.1 * jax.random.uniform(k_s, (out_features, n_groups), dtype=jnp.float32)
    zero = 15.0 * jax.random.uniform(k_z, (out_features, n_groups), dtype=jnp.float32)
    bias = jax.random.normal(k_b, (out_features,), dtype=jnp.float32)

    # One-time offline repack (weight-load time, not per forward call).
    qweight_k = repack_for_kernel(qweight, bits=bits, group_size=group_size)

    def run_and_check(x, tag, **kw):
        y = quantized_linear(x, qweight_k, scale, zero, bias,
                             bits=bits, group_size=group_size, **kw)
        y = jax.block_until_ready(y)
        y_ref = reference_forward(x, qweight, scale, zero, bias, bits, group_size)
        assert y.shape == y_ref.shape, (tag, y.shape, y_ref.shape)
        # bf16 MXU operands with f32 accumulation: compare with a relative tolerance.
        err = float(jnp.max(jnp.abs(y.astype(jnp.float32) - y_ref)))
        ref_mag = float(jnp.max(jnp.abs(y_ref)))
        assert err <= 2e-2 * ref_mag + 1e-2, (tag, err, ref_mag)

    # Decode-shaped call (batch=2, seq=8 -> M=16 -> scale-after-matmul kernel).
    # block_k=512 gives two K-reduction grid steps, exercising the accumulator path.
    x_dec = jax.random.normal(k_x1, (2, 8, in_features), dtype=jnp.float32)
    run_and_check(x_dec, "decode", block_k=512)

    # Prefill-shaped call (M=256 -> consolidated dequant-scratch + single-dot kernel).
    x_pre = jax.random.normal(k_x2, (2, 128, in_features), dtype=jnp.float32)
    run_and_check(x_pre, "prefill", block_k=512)

    print("KERNEL_OK")
</pallas_src>

<mosaic_0001>
module attributes {stable_mosaic.version = 11 : i64} {
  func.func @_qlinear_decode_kernel(%arg0: i32, %arg1: i32, %arg2: i32, %arg3: memref<256x128xi8, #tpu.memory_space<vmem>>, %arg4: memref<1x4x128xf32, #tpu.memory_space<vmem>>, %arg5: memref<1x4x128xf32, #tpu.memory_space<vmem>>, %arg6: memref<1x128xf32, #tpu.memory_space<vmem>>, %arg7: memref<16x512xbf16, #tpu.memory_space<vmem>>, %arg8: memref<16x128xf32, #tpu.memory_space<vmem>>, %arg9: memref<16x128xf32, #tpu.memory_space<vmem>>) attributes {dimension_semantics = [#tpu.dimension_semantics<parallel>, #tpu.dimension_semantics<parallel>, #tpu.dimension_semantics<arbitrary>], iteration_bounds = array<i64: 1, 2, 2>, scalar_prefetch = 0 : i64, scratch_operands = 1 : i64, tpu.core_type = #tpu.core_type<tc>, window_params = [{transform_indices = @transform_0, window_bounds = array<i64: 256, 128>}, {transform_indices = @transform_1, window_bounds = array<i64: 1, 4, 128>}, {transform_indices = @transform_2, window_bounds = array<i64: 1, 4, 128>}, {transform_indices = @transform_3, window_bounds = array<i64: 1, 128>}, {transform_indices = @transform_4, window_bounds = array<i64: 16, 512>}, {transform_indices = @transform_5, window_bounds = array<i64: 16, 128>}]} {
    %c0_i32 = arith.constant 0 : i32
    %0 = arith.cmpi eq, %arg2, %c0_i32 : i32
    %1 = arith.extui %0 : i1 to i32
    %c0_i32_0 = arith.constant 0 : i32
    %2 = arith.cmpi ne, %1, %c0_i32_0 : i32
    scf.if %2 {
      %cst_47 = arith.constant 0.000000e+00 : f32
      %131 = vector.broadcast %cst_47 : f32 to vector<16x128xf32>
      %c0_48 = arith.constant 0 : index
      %c0_49 = arith.constant 0 : index
      %132 = vector.load %arg9[%c0_48, %c0_49] : memref<16x128xf32, #tpu.memory_space<vmem>>, vector<16x128xf32>
      tpu.vector_store %arg9[%c0_48, %c0_49], %131 {strides = array<i32>} : memref<16x128xf32, #tpu.memory_space<vmem>>, vector<16x128xf32>,
    } else {
    }
    %c0 = arith.constant 0 : index
    %c0_1 = arith.constant 0 : index
    %c0_2 = arith.constant 0 : index
    %3 = vector.load %arg4[%c0, %c0_1, %c0_2] : memref<1x4x128xf32, #tpu.memory_space<vmem>>, vector<1x4x128xf32>
    %4 = vector.shape_cast %3 : vector<1x4x128xf32> to vector<4x128xf32>
    %c0_3 = arith.constant 0 : index
    %c0_4 = arith.constant 0 : index
    %c0_5 = arith.constant 0 : index
    %5 = vector.load %arg5[%c0_3, %c0_4, %c0_5] : memref<1x4x128xf32, #tpu.memory_space<vmem>>, vector<1x4x128xf32>
    %6 = vector.shape_cast %5 : vector<1x4x128xf32> to vector<4x128xf32>
    %c0_6 = arith.constant 0 : index
    %c0_7 = arith.constant 0 : index
    %7 = vector.load %arg7[%c0_6, %c0_7] : memref<16x512xbf16, #tpu.memory_space<vmem>>, vector<16x512xbf16>
    %c0_8 = arith.constant 0 : index
    %c0_9 = arith.constant 0 : index
    %8 = vector.load %arg3[%c0_8, %c0_9] : memref<256x128xi8, #tpu.memory_space<vmem>>, vector<64x128xi8>
    %9 = arith.extui %8 : vector<64x128xi8> to vector<64x128xi32>
    %c15_i32 = arith.constant 15 : i32
    %10 = vector.broadcast %c15_i32 : i32 to vector<64x128xi32>
    %11 = arith.andi %9, %10 : vector<64x128xi32>
    %12 = arith.sitofp %11 : vector<64x128xi32> to vector<64x128xf32>
    %13 = arith.truncf %12 : vector<64x128xf32> to vector<64x128xbf16>
    %c4_i32 = arith.constant 4 : i32
    %14 = vector.broadcast %c4_i32 : i32 to vector<64x128xi32>
    %15 = arith.shrsi %9, %14 : vector<64x128xi32>
    %16 = arith.sitofp %15 : vector<64x128xi32> to vector<64x128xf32>
    %17 = arith.truncf %16 : vector<64x128xf32> to vector<64x128xbf16>
    %18 = vector.extract_strided_slice %7 {offsets = [0, 0], sizes = [16, 128], strides = [1, 1]} : vector<16x512xbf16> to vector<16x128xbf16>
    %19 = vector.extract_strided_slice %18 {offsets = [0, 0], sizes = [16, 64], strides = [1, 1]} : vector<16x128xbf16> to vector<16x64xbf16>
    %cst = arith.constant dense<0.000000e+00> : vector<16x128xf32>
    %20 = tpu.matmul %19, %13, %cst {dimension_numbers = #tpu.dot_dimension_numbers<[1], [0], [0], [1], [0, 0, 1, 1], [], []>} : vector<16x64xbf16>, vector<64x128xbf16>, vector<16x128xf32> -> vector<16x128xf32>
    %21 = vector.extract_strided_slice %18 {offsets = [0, 64], sizes = [16, 64], strides = [1, 1]} : vector<16x128xbf16> to vector<16x64xbf16>
    %cst_10 = arith.constant dense<0.000000e+00> : vector<16x128xf32>
    %22 = tpu.matmul %21, %17, %cst_10 {dimension_numbers = #tpu.dot_dimension_numbers<[1], [0], [0], [1], [0, 0, 1, 1], [], []>} : vector<16x64xbf16>, vector<64x128xbf16>, vector<16x128xf32> -> vector<16x128xf32>
    %23 = arith.addf %20, %22 : vector<16x128xf32>
    %24 = arith.extf %18 : vector<16x128xbf16> to vector<16x128xf32>
    %cst_11 = arith.constant dense<0.000000e+00> : vector<16xf32>
    %25 = vector.multi_reduction <add>, %24, %cst_11 [1] : vector<16x128xf32> to vector<16xf32>
    %26 = vector.shape_cast %25 : vector<16xf32> to vector<16x1xf32>
    %c0_12 = arith.constant 0 : index
    %c0_13 = arith.constant 0 : index
    %27 = vector.load %arg9[%c0_12, %c0_13] : memref<16x128xf32, #tpu.memory_space<vmem>>, vector<16x128xf32>
    %28 = vector.extract_strided_slice %4 {offsets = [0, 0], sizes = [1, 128], strides = [1, 1]} : vector<4x128xf32> to vector<1x128xf32>
    %29 = vector.broadcast %28 : vector<1x128xf32> to vector<16x128xf32>
    %30 = arith.mulf %23, %29 : vector<16x128xf32>
    %31 = vector.extract_strided_slice %6 {offsets = [0, 0], sizes = [1, 128], strides = [1, 1]} : vector<4x128xf32> to vector<1x128xf32>
    %32 = vector.broadcast %26 : vector<16x1xf32> to vector<16x128xf32>
    %33 = vector.broadcast %31 : vector<1x128xf32> to vector<16x128xf32>
    %34 = arith.mulf %32, %33 : vector<16x128xf32>
    %35 = arith.subf %30, %34 : vector<16x128xf32>
    %36 = arith.addf %27, %35 : vector<16x128xf32>
    %c0_14 = arith.constant 0 : index
    %c0_15 = arith.constant 0 : index
    %37 = vector.load %arg9[%c0_14, %c0_15] : memref<16x128xf32, #tpu.memory_space<vmem>>, vector<16x128xf32>
    tpu.vector_store %arg9[%c0_14, %c0_15], %36 {strides = array<i32>} : memref<16x128xf32, #tpu.memory_space<vmem>>, vector<16x128xf32>,
    %c64 = arith.constant 64 : index
    %c0_16 = arith.constant 0 : index
    %38 = vector.load %arg3[%c64, %c0_16] : memref<256x128xi8, #tpu.memory_space<vmem>>, vector<64x128xi8>
    %39 = arith.extui %38 : vector<64x128xi8> to vector<64x128xi32>
    %c15_i32_17 = arith.constant 15 : i32
    %40 = vector.broadcast %c15_i32_17 : i32 to vector<64x128xi32>
    %41 = arith.andi %39, %40 : vector<64x128xi32>
    %42 = arith.sitofp %41 : vector<64x128xi32> to vector<64x128xf32>
    %43 = arith.truncf %42 : vector<64x128xf32> to vector<64x128xbf16>
    %c4_i32_18 = arith.constant 4 : i32
    %44 = vector.broadcast %c4_i32_18 : i32 to vector<64x128xi32>
    %45 = arith.shrsi %39, %44 : vector<64x128xi32>
    %46 = arith.sitofp %45 : vector<64x128xi32> to vector<64x128xf32>
    %47 = arith.truncf %46 : vector<64x128xf32> to vector<64x128xbf16>
    %48 = vector.extract_strided_slice %7 {offsets = [0, 128], sizes = [16, 128], strides = [1, 1]} : vector<16x512xbf16> to vector<16x128xbf16>
    %49 = vector.extract_strided_slice %48 {offsets = [0, 0], sizes = [16, 64], strides = [1, 1]} : vector<16x128xbf16> to vector<16x64xbf16>
    %cst_19 = arith.constant dense<0.000000e+00> : vector<16x128xf32>
    %50 = tpu.matmul %49, %43, %cst_19 {dimension_numbers = #tpu.dot_dimension_numbers<[1], [0], [0], [1], [0, 0, 1, 1], [], []>} : vector<16x64xbf16>, vector<64x128xbf16>, vector<16x128xf32> -> vector<16x128xf32>
    %51 = vector.extract_strided_slice %48 {offsets = [0, 64], sizes = [16, 64], strides = [1, 1]} : vector<16x128xbf16> to vector<16x64xbf16>
    %cst_20 = arith.constant dense<0.000000e+00> : vector<16x128xf32>
    %52 = tpu.matmul %51, %47, %cst_20 {dimension_numbers = #tpu.dot_dimension_numbers<[1], [0], [0], [1], [0, 0, 1, 1], [], []>} : vector<16x64xbf16>, vector<64x128xbf16>, vector<16x128xf32> -> vector<16x128xf32>
    %53 = arith.addf %50, %52 : vector<16x128xf32>
    %54 = arith.extf %48 : vector<16x128xbf16> to vector<16x128xf32>
    %cst_21 = arith.constant dense<0.000000e+00> : vector<16xf32>
    %55 = vector.multi_reduction <add>, %54, %cst_21 [1] : vector<16x128xf32> to vector<16xf32>
    %56 = vector.shape_cast %55 : vector<16xf32> to vector<16x1xf32>
    %c0_22 = arith.constant 0 : index
    %c0_23 = arith.constant 0 : index
    %57 = vector.load %arg9[%c0_22, %c0_23] : memref<16x128xf32, #tpu.memory_space<vmem>>, vector<16x128xf32>
    %58 = vector.extract_strided_slice %4 {offsets = [1, 0], sizes = [1, 128], strides = [1, 1]} : vector<4x128xf32> to vector<1x128xf32>
    %59 = vector.broadcast %58 : vector<1x128xf32> to vector<16x128xf32>
    %60 = arith.mulf %53, %59 : vector<16x128xf32>
    %61 = vector.extract_strided_slice %6 {offsets = [1, 0], sizes = [1, 128], strides = [1, 1]} : vector<4x128xf32> to vector<1x128xf32>
    %62 = vector.broadcast %56 : vector<16x1xf32> to vector<16x128xf32>
    %63 = vector.broadcast %61 : vector<1x128xf32> to vector<16x128xf32>
    %64 = arith.mulf %62, %63 : vector<16x128xf32>
    %65 = arith.subf %60, %64 : vector<16x128xf32>
    %66 = arith.addf %57, %65 : vector<16x128xf32>
    %c0_24 = arith.constant 0 : index
    %c0_25 = arith.constant 0 : index
    %67 = vector.load %arg9[%c0_24, %c0_25] : memref<16x128xf32, #tpu.memory_space<vmem>>, vector<16x128xf32>
    tpu.vector_store %arg9[%c0_24, %c0_25], %66 {strides = array<i32>} : memref<16x128xf32, #tpu.memory_space<vmem>>, vector<16x128xf32>,
    %c128 = arith.constant 128 : index
    %c0_26 = arith.constant 0 : index
    %68 = vector.load %arg3[%c128, %c0_26] : memref<256x128xi8, #tpu.memory_space<vmem>>, vector<64x128xi8>
    %69 = arith.extui %68 : vector<64x128xi8> to vector<64x128xi32>
    %c15_i32_27 = arith.constant 15 : i32
    %70 = vector.broadcast %c15_i32_27 : i32 to vector<64x128xi32>
    %71 = arith.andi %69, %70 : vector<64x128xi32>
    %72 = arith.sitofp %71 : vector<64x128xi32> to vector<64x128xf32>
    %73 = arith.truncf %72 : vector<64x128xf32> to vector<64x128xbf16>
    %c4_i32_28 = arith.constant 4 : i32
    %74 = vector.broadcast %c4_i32_28 : i32 to vector<64x128xi32>
    %75 = arith.shrsi %69, %74 : vector<64x128xi32>
    %76 = arith.sitofp %75 : vector<64x128xi32> to vector<64x128xf32>
    %77 = arith.truncf %76 : vector<64x128xf32> to vector<64x128xbf16>
    %78 = vector.extract_strided_slice %7 {offsets = [0, 256], sizes = [16, 128], strides = [1, 1]} : vector<16x512xbf16> to vector<16x128xbf16>
    %79 = vector.extract_strided_slice %78 {offsets = [0, 0], sizes = [16, 64], strides = [1, 1]} : vector<16x128xbf16> to vector<16x64xbf16>
    %cst_29 = arith.constant dense<0.000000e+00> : vector<16x128xf32>
    %80 = tpu.matmul %79, %73, %cst_29 {dimension_numbers = #tpu.dot_dimension_numbers<[1], [0], [0], [1], [0, 0, 1, 1], [], []>} : vector<16x64xbf16>, vector<64x128xbf16>, vector<16x128xf32> -> vector<16x128xf32>
    %81 = vector.extract_strided_slice %78 {offsets = [0, 64], sizes = [16, 64], strides = [1, 1]} : vector<16x128xbf16> to vector<16x64xbf16>
    %cst_30 = arith.constant dense<0.000000e+00> : vector<16x128xf32>
    %82 = tpu.matmul %81, %77, %cst_30 {dimension_numbers = #tpu.dot_dimension_numbers<[1], [0], [0], [1], [0, 0, 1, 1], [], []>} : vector<16x64xbf16>, vector<64x128xbf16>, vector<16x128xf32> -> vector<16x128xf32>
    %83 = arith.addf %80, %82 : vector<16x128xf32>
    %84 = arith.extf %78 : vector<16x128xbf16> to vector<16x128xf32>
    %cst_31 = arith.constant dense<0.000000e+00> : vector<16xf32>
    %85 = vector.multi_reduction <add>, %84, %cst_31 [1] : vector<16x128xf32> to vector<16xf32>
    %86 = vector.shape_cast %85 : vector<16xf32> to vector<16x1xf32>
    %c0_32 = arith.constant 0 : index
    %c0_33 = arith.constant 0 : index
    %87 = vector.load %arg9[%c0_32, %c0_33] : memref<16x128xf32, #tpu.memory_space<vmem>>, vector<16x128xf32>
    %88 = vector.extract_strided_slice %4 {offsets = [2, 0], sizes = [1, 128], strides = [1, 1]} : vector<4x128xf32> to vector<1x128xf32>
    %89 = vector.broadcast %88 : vector<1x128xf32> to vector<16x128xf32>
    %90 = arith.mulf %83, %89 : vector<16x128xf32>
    %91 = vector.extract_strided_slice %6 {offsets = [2, 0], sizes = [1, 128], strides = [1, 1]} : vector<4x128xf32> to vector<1x128xf32>
    %92 = vector.broadcast %86 : vector<16x1xf32> to vector<16x128xf32>
    %93 = vector.broadcast %91 : vector<1x128xf32> to vector<16x128xf32>
    %94 = arith.mulf %92, %93 : vector<16x128xf32>
    %95 = arith.subf %90, %94 : vector<16x128xf32>
    %96 = arith.addf %87, %95 : vector<16x128xf32>
    %c0_34 = arith.constant 0 : index
    %c0_35 = arith.constant 0 : index
    %97 = vector.load %arg9[%c0_34, %c0_35] : memref<16x128xf32, #tpu.memory_space<vmem>>, vector<16x128xf32>
    tpu.vector_store %arg9[%c0_34, %c0_35], %96 {strides = array<i32>} : memref<16x128xf32, #tpu.memory_space<vmem>>, vector<16x128xf32>,
    %c192 = arith.constant 192 : index
    %c0_36 = arith.constant 0 : index
    %98 = vector.load %arg3[%c192, %c0_36] : memref<256x128xi8, #tpu.memory_space<vmem>>, vector<64x128xi8>
    %99 = arith.extui %98 : vector<64x128xi8> to vector<64x128xi32>
    %c15_i32_37 = arith.constant 15 : i32
    %100 = vector.broadcast %c15_i32_37 : i32 to vector<64x128xi32>
    %101 = arith.andi %99, %100 : vector<64x128xi32>
    %102 = arith.sitofp %101 : vector<64x128xi32> to vector<64x128xf32>
    %103 = arith.truncf %102 : vector<64x128xf32> to vector<64x128xbf16>
    %c4_i32_38 = arith.constant 4 : i32
    %104 = vector.broadcast %c4_i32_38 : i32 to vector<64x128xi32>
    %105 = arith.shrsi %99, %104 : vector<64x128xi32>
    %106 = arith.sitofp %105 : vector<64x128xi32> to vector<64x128xf32>
    %107 = arith.truncf %106 : vector<64x128xf32> to vector<64x128xbf16>
    %108 = vector.extract_strided_slice %7 {offsets = [0, 384], sizes = [16, 128], strides = [1, 1]} : vector<16x512xbf16> to vector<16x128xbf16>
    %109 = vector.extract_strided_slice %108 {offsets = [0, 0], sizes = [16, 64], strides = [1, 1]} : vector<16x128xbf16> to vector<16x64xbf16>
    %cst_39 = arith.constant dense<0.000000e+00> : vector<16x128xf32>
    %110 = tpu.matmul %109, %103, %cst_39 {dimension_numbers = #tpu.dot_dimension_numbers<[1], [0], [0], [1], [0, 0, 1, 1], [], []>} : vector<16x64xbf16>, vector<64x128xbf16>, vector<16x128xf32> -> vector<16x128xf32>
    %111 = vector.extract_strided_slice %108 {offsets = [0, 64], sizes = [16, 64], strides = [1, 1]} : vector<16x128xbf16> to vector<16x64xbf16>
    %cst_40 = arith.constant dense<0.000000e+00> : vector<16x128xf32>
    %112 = tpu.matmul %111, %107, %cst_40 {dimension_numbers = #tpu.dot_dimension_numbers<[1], [0], [0], [1], [0, 0, 1, 1], [], []>} : vector<16x64xbf16>, vector<64x128xbf16>, vector<16x128xf32> -> vector<16x128xf32>
    %113 = arith.addf %110, %112 : vector<16x128xf32>
    %114 = arith.extf %108 : vector<16x128xbf16> to vector<16x128xf32>
    %cst_41 = arith.constant dense<0.000000e+00> : vector<16xf32>
    %115 = vector.multi_reduction <add>, %114, %cst_41 [1] : vector<16x128xf32> to vector<16xf32>
    %116 = vector.shape_cast %115 : vector<16xf32> to vector<16x1xf32>
    %c0_42 = arith.constant 0 : index
    %c0_43 = arith.constant 0 : index
    %117 = vector.load %arg9[%c0_42, %c0_43] : memref<16x128xf32, #tpu.memory_space<vmem>>, vector<16x128xf32>
    %118 = vector.extract_strided_slice %4 {offsets = [3, 0], sizes = [1, 128], strides = [1, 1]} : vector<4x128xf32> to vector<1x128xf32>
    %119 = vector.broadcast %118 : vector<1x128xf32> to vector<16x128xf32>
    %120 = arith.mulf %113, %119 : vector<16x128xf32>
    %121 = vector.extract_strided_slice %6 {offsets = [3, 0], sizes = [1, 128], strides = [1, 1]} : vector<4x128xf32> to vector<1x128xf32>
    %122 = vector.broadcast %116 : vector<16x1xf32> to vector<16x128xf32>
    %123 = vector.broadcast %121 : vector<1x128xf32> to vector<16x128xf32>
    %124 = arith.mulf %122, %123 : vector<16x128xf32>
    %125 = arith.subf %120, %124 : vector<16x128xf32>
    %126 = arith.addf %117, %125 : vector<16x128xf32>
    %c0_44 = arith.constant 0 : index
    %c0_45 = arith.constant 0 : index
    %127 = vector.load %arg9[%c0_44, %c0_45] : memref<16x128xf32, #tpu.memory_space<vmem>>, vector<16x128xf32>
    tpu.vector_store %arg9[%c0_44, %c0_45], %126 {strides = array<i32>} : memref<16x128xf32, #tpu.memory_space<vmem>>, vector<16x128xf32>,
    %c1_i32 = arith.constant 1 : i32
    %128 = arith.cmpi eq, %arg2, %c1_i32 : i32
    %129 = arith.extui %128 : i1 to i32
    %c0_i32_46 = arith.constant 0 : i32
    %130 = arith.cmpi ne, %129, %c0_i32_46 : i32
    scf.if %130 {
      %c0_47 = arith.constant 0 : index
      %c0_48 = arith.constant 0 : index
      %131 = vector.load %arg9[%c0_47, %c0_48] : memref<16x128xf32, #tpu.memory_space<vmem>>, vector<16x128xf32>
      %c0_49 = arith.constant 0 : index
      %c0_50 = arith.constant 0 : index
      %132 = vector.load %arg6[%c0_49, %c0_50] : memref<1x128xf32, #tpu.memory_space<vmem>>, vector<1x128xf32>
      %133 = vector.broadcast %132 : vector<1x128xf32> to vector<16x128xf32>
      %134 = arith.addf %131, %133 : vector<16x128xf32>
      %c0_51 = arith.constant 0 : index
      %c0_52 = arith.constant 0 : index
      %135 = vector.load %arg8[%c0_51, %c0_52] : memref<16x128xf32, #tpu.memory_space<vmem>>, vector<16x128xf32>
      tpu.vector_store %arg8[%c0_51, %c0_52], %134 {strides = array<i32>} : memref<16x128xf32, #tpu.memory_space<vmem>>, vector<16x128xf32>,
    } else {
    }
    return
  }
  func.func @transform_0(%arg0: i32, %arg1: i32, %arg2: i32) -> (i32, i32) {
    %c0_i32 = arith.constant 0 : i32
    return %arg2, %arg1 : i32, i32
  }
  func.func @transform_1(%arg0: i32, %arg1: i32, %arg2: i32) -> (i32, i32, i32) {
    %c0_i32 = arith.constant 0 : i32
    %c0_i32_0 = arith.constant 0 : i32
    return %arg2, %c0_i32, %arg1 : i32, i32, i32
  }
  func.func @transform_2(%arg0: i32, %arg1: i32, %arg2: i32) -> (i32, i32, i32) {
    %c0_i32 = arith.constant 0 : i32
    %c0_i32_0 = arith.constant 0 : i32
    return %arg2, %c0_i32, %arg1 : i32, i32, i32
  }
  func.func @transform_3(%arg0: i32, %arg1: i32, %arg2: i32) -> (i32, i32) {
    %c0_i32 = arith.constant 0 : i32
    %c0_i32_0 = arith.constant 0 : i32
    return %c0_i32, %arg1 : i32, i32
  }
  func.func @transform_4(%arg0: i32, %arg1: i32, %arg2: i32) -> (i32, i32) {
    %c0_i32 = arith.constant 0 : i32
    return %arg0, %arg2 : i32, i32
  }
  func.func @transform_5(%arg0: i32, %arg1: i32, %arg2: i32) -> (i32, i32) {
    %c0_i32 = arith.constant 0 : i32
    return %arg0, %arg1 : i32, i32
  }
}

</mosaic_0001>

<llo_original>
// kernel: quantized_linear.1
$region0: #{quantized_linear.1}
  #allocation0 [shape = 'u32[]', space=smem, size = 0x4, offset = 0x4, fixed_abs, tag = 'smem constant byte address 0x4 - core index']
  #allocation1 [shape = 'u32[72,128]{1,0:T(1,128)}', space=vmem, size = 0x9000, scoped, tag = 'internal scratch']
  #allocation2 [shape = 'f32[16,128]{1,0:T(8,128)}', space=vmem, size = 0x2000, scoped, tag = 'scratch operand']
  %s0 = inlined_call_operand.hbm [shape: u8[512,256], index: 0, kind: input, shape index: {}]
  %s1 = inlined_call_operand.vmem [shape: f32[2,4,256], index: 1, kind: input, shape index: {}]
  %s2 = inlined_call_operand.vmem [shape: f32[2,4,256], index: 2, kind: input, shape index: {}]
  %s3 = inlined_call_operand.vmem [shape: f32[1,256], index: 3, kind: input, shape index: {}]
  %s4 = inlined_call_operand.vmem [shape: bf16[16,1024], index: 4, kind: input, shape index: {}]
  %s5 = inlined_call_operand.hbm [shape: f32[16,256], index: 5, kind: output, shape index: {}]
  %s6 = sld [smem:[#allocation0]]
  $region88: #{quantized_linear.1} parent=0
    _
  %s8 = ssub.s32 1, %s6
  %s9 = scalar_select 0, %s8, %s6
  $region1: #{quantized_linear.1} parent=0
    #allocation3 [shape = 'u8[65536]{0}', space=vmem, size = 0x10000, scoped, tag = 'input window, operand 0']
    #allocation4 [shape = 's32[2]{0}', space=sflag, size = 0x8, scoped, tag = 'scoped memory for quantized_linear.1']
    #allocation5 [shape = 's32[2]{0}', space=sflag, size = 0x8, scoped, tag = 'scoped memory for quantized_linear.1']
    #allocation6 [shape = 'u8[32768]{0}', space=vmem, size = 0x8000, scoped, tag = 'input window, operand 4']
    #allocation7 [shape = 'u8[16384]{0}', space=vmem, size = 0x4000, scoped, tag = 'output window, operand 0']
    %10 = vsyncpa [#allocation4], 0
    %s11 = scalar_lea.sflag [#allocation4], 1
    %12 = vsyncpa %s11, 0
    %13 = vsyncpa [#allocation5], 0
    %s14 = scalar_lea.sflag [#allocation5], 1
    %15 = vsyncpa %s14, 0
    loop: start=0, step=1, limit=6
    $region2: #{quantized_linear.1} parent=1 // loop_pre_header
      _
    $region3: #{quantized_linear.1} parent=1 // loop_header
      %s17 = sphi 0, %s21
      %p18 = scmp.ge.s32.totalorder %s17, 6
      %s24 = sphi 0, %s43
      %s25 = sphi 0, %s39
      %s26 = sphi 0, %s35
      %s27 = sphi 0, %s24
      %s28 = sphi 0, %s25
      %s29 = sphi 0, %s26
      %s30 = sphi 0, %s27
      %s31 = sphi 0, %s28
      %s32 = sphi 0, %s29
      %s48 = sphi 0, %s50
      %s51 = sphi 0, %s48
      %s52 = sphi 0, %s51
      %s68 = sphi 0, %s52
      %s76 = sphi 0, %s78
      %s79 = sphi 0, %s76
      %s80 = sphi 0, %s79
      %s96 = sphi 0, %s80
      %s104 = sphi 0, %s106
      %s107 = sphi 0, %s104
      %s108 = sphi 0, %s107
      %s124 = sphi 0, %s108
      %s130 = sphi 0, %s132
      %s133 = sphi 0, %s130
      %s134 = sphi 0, %s133
      %s150 = sphi 0, %s134
      %s158 = sphi 0, %s160
      %s161 = sphi 0, %s158
      %s162 = sphi 0, %s161
      %s178 = sphi 0, %s162
      %s186 = sphi 0, %s188
      %s189 = sphi 0, %s186
      %s190 = sphi 0, %s189
      %s206 = sphi 0, %s190
    $region4: #{quantized_linear.1} parent=1 // loop_header_branch
      %20 = sbr.rel (%p18) target = $region8
    $region5: #{quantized_linear.1} parent=1 // loop_body
      %s22 = ssub.s32 %s17, 1
      %s23 = ssub.s32 %s17, 2
      %s33 = sadd.s32 1, %s26
      %p34 = scmp.ge.s32.totalorder %s33, 2
      %s35 = scalar_select %p34, 0, %s33
      %s36 = sadd.s32 1, %s25
      %s37 = scalar_select %p34, %s36, %s25
      %p38 = scmp.ge.s32.totalorder %s37, 2
      %s39 = scalar_select %p38, 0, %s37
      %s40 = sadd.s32 1, %s24
      %s41 = scalar_select %p38, %s40, %s24
      %p42 = scmp.ge.s32.totalorder %s41, 1
      %s43 = scalar_select %p42, 0, %s41
      %s44 = ssub.s32 %s26, %s35
      %s45 = ssub.s32 %s25, %s39
      %s46 = sor.u32 %s44, %s45
      %p47 = scmp.eq.s32.totalorder %s46, 0
      %s49 = sadd.s32 %s48, 1
      %s50 = scalar_select %p47, %s48, %s49
      %p53 = pneg %p47
      %p54 = scmp.eq.s32.totalorder %s17, 3
      %p55 = por %p53, %p54
      %p56 = scmp.ne.s32.totalorder %s48, %s51
      %p57 = scmp.eq.s32.totalorder %s17, 0
      %p58 = por %p56, %p57
      %p59 = scmp.ne.s32.totalorder %s48, %s51
      %p60 = scmp.eq.s32.totalorder %s22, 3
      %p61 = por %p59, %p60
      %p62 = scmp.ne.s32.totalorder %s51, %s52
      %p63 = scmp.eq.s32.totalorder %s22, 0
      %p64 = por %p62, %p63
      %p65 = scmp.ne.s32.totalorder %s51, %s52
      %p66 = scmp.eq.s32.totalorder %s23, 3
      %p67 = por %p65, %p66
      %p69 = scmp.ne.s32.totalorder %s52, %s68
      %p70 = scmp.eq.s32.totalorder %s23, 0
      %p71 = por %p69, %p70
      %s72 = ssub.s32 %s26, %s35
      %s73 = ssub.s32 %s25, %s39
      %s74 = sor.u32 %s72, %s73
      %p75 = scmp.eq.s32.totalorder %s74, 0
      %s77 = sadd.s32 %s76, 1
      %s78 = scalar_select %p75, %s76, %s77
      %p81 = pneg %p75
      %p82 = scmp.eq.s32.totalorder %s17, 3
      %p83 = por %p81, %p82
      %p84 = scmp.ne.s32.totalorder %s76, %s79
      %p85 = scmp.eq.s32.totalorder %s17, 0
      %p86 = por %p84, %p85
      %p87 = scmp.ne.s32.totalorder %s76, %s79
      %p88 = scmp.eq.s32.totalorder %s22, 3
      %p89 = por %p87, %p88
      %p90 = scmp.ne.s32.totalorder %s79, %s80
      %p91 = scmp.eq.s32.totalorder %s22, 0
      %p92 = por %p90, %p91
      %p93 = scmp.ne.s32.totalorder %s79, %s80
      %p94 = scmp.eq.s32.totalorder %s23, 3
      %p95 = por %p93, %p94
      %p97 = scmp.ne.s32.totalorder %s80, %s96
      %p98 = scmp.eq.s32.totalorder %s23, 0
      %p99 = por %p97, %p98
      %s100 = ssub.s32 %s26, %s35
      %s101 = ssub.s32 %s25, %s39
      %s102 = sor.u32 %s100, %s101
      %p103 = scmp.eq.s32.totalorder %s102, 0
      %s105 = sadd.s32 %s104, 1
      %s106 = scalar_select %p103, %s104, %s105
      %p109 = pneg %p103
      %p110 = scmp.eq.s32.totalorder %s17, 3
      %p111 = por %p109, %p110
      %p112 = scmp.ne.s32.totalorder %s104, %s107
      %p113 = scmp.eq.s32.totalorder %s17, 0
      %p114 = por %p112, %p113
      %p115 = scmp.ne.s32.totalorder %s104, %s107
      %p116 = scmp.eq.s32.totalorder %s22, 3
      %p117 = por %p115, %p116
      %p118 = scmp.ne.s32.totalorder %s107, %s108
      %p119 = scmp.eq.s32.totalorder %s22, 0
      %p120 = por %p118, %p119
      %p121 = scmp.ne.s32.totalorder %s107, %s108
      %p122 = scmp.eq.s32.totalorder %s23, 3
      %p123 = por %p121, %p122
      %p125 = scmp.ne.s32.totalorder %s108, %s124
      %p126 = scmp.eq.s32.totalorder %s23, 0
      %p127 = por %p125, %p126
      %s128 = ssub.s32 %s25, %s39
      %p129 = scmp.eq.s32.totalorder %s128, 0
      %s131 = sadd.s32 %s130, 1
      %s132 = scalar_select %p129, %s130, %s131
      %p135 = pneg %p129
      %p136 = scmp.eq.s32.totalorder %s17, 3
      %p137 = por %p135, %p136
      %p138 = scmp.ne.s32.totalorder %s130, %s133
      %p139 = scmp.eq.s32.totalorder %s17, 0
      %p140 = por %p138, %p139
      %p141 = scmp.ne.s32.totalorder %s130, %s133
      %p142 = scmp.eq.s32.totalorder %s22, 3
      %p143 = por %p141, %p142
      %p144 = scmp.ne.s32.totalorder %s133, %s134
      %p145 = scmp.eq.s32.totalorder %s22, 0
      %p146 = por %p144, %p145
      %p147 = scmp.ne.s32.totalorder %s133, %s134
      %p148 = scmp.eq.s32.totalorder %s23, 3
      %p149 = por %p147, %p148
      %p151 = scmp.ne.s32.totalorder %s134, %s150
      %p152 = scmp.eq.s32.totalorder %s23, 0
      %p153 = por %p151, %p152
      %s154 = ssub.s32 %s24, %s43
      %s155 = ssub.s32 %s26, %s35
      %s156 = sor.u32 %s154, %s155
      %p157 = scmp.eq.s32.totalorder %s156, 0
      %s159 = sadd.s32 %s158, 1
      %s160 = scalar_select %p157, %s158, %s159
      %p163 = pneg %p157
      %p164 = scmp.eq.s32.totalorder %s17, 3
      %p165 = por %p163, %p164
      %p166 = scmp.ne.s32.totalorder %s158, %s161
      %p167 = scmp.eq.s32.totalorder %s17, 0
      %p168 = por %p166, %p167
      %p169 = scmp.ne.s32.totalorder %s158, %s161
      %p170 = scmp.eq.s32.totalorder %s22, 3
      %p171 = por %p169, %p170
      %p172 = scmp.ne.s32.totalorder %s161, %s162
      %p173 = scmp.eq.s32.totalorder %s22, 0
      %p174 = por %p172, %p173
      %p175 = scmp.ne.s32.totalorder %s161, %s162
      %p176 = scmp.eq.s32.totalorder %s23, 3
      %p177 = por %p175, %p176
      %p179 = scmp.ne.s32.totalorder %s162, %s178
      %p180 = scmp.eq.s32.totalorder %s23, 0
      %p181 = por %p179, %p180
      %s182 = ssub.s32 %s24, %s43
      %s183 = ssub.s32 %s25, %s39
      %s184 = sor.u32 %s182, %s183
      %p185 = scmp.eq.s32.totalorder %s184, 0
      %s187 = sadd.s32 %s186, 1
      %s188 = scalar_select %p185, %s186, %s187
      %p191 = pneg %p185
      %p192 = scmp.eq.s32.totalorder %s17, 3
      %p193 = por %p191, %p192
      %p194 = scmp.ne.s32.totalorder %s186, %s189
      %p195 = scmp.eq.s32.totalorder %s17, 0
      %p196 = por %p194, %p195
      %p197 = scmp.ne.s32.totalorder %s186, %s189
      %p198 = scmp.eq.s32.totalorder %s22, 3
      %p199 = por %p197, %p198
      %p200 = scmp.ne.s32.totalorder %s189, %s190
      %p201 = scmp.eq.s32.totalorder %s22, 0
      %p202 = por %p200, %p201
      %p203 = scmp.ne.s32.totalorder %s189, %s190
      %p204 = scmp.eq.s32.totalorder %s23, 3
      %p205 = por %p203, %p204
      %p207 = scmp.ne.s32.totalorder %s190, %s206
      %p208 = scmp.eq.s32.totalorder %s23, 0
      %p209 = por %p207, %p208
      %p210 = scmp.le.s32.totalorder 1, %s17
      %p211 = scmp.lt.s32.totalorder %s17, 5
      %p212 = pnand %p210, %p211
      %p213 = pneg %p212
      // Predicated region
      $region9: #{quantized_linear.1} parent=5 // pred_check
        _
      $region10: #{quantized_linear.1} parent=5 // pred_check_branch
        %215 = sbr.rel (%p212) target = $region12
      $region11: #{quantized_linear.1} parent=5 // pred_region
        %s216 = ssub.s32 %s17, 1
      $region12: #{quantized_linear.1} parent=5 // pred_fallthru
        _
      %p217 = scmp.lt.s32.totalorder %s17, 4
      // Predicated region
      $region13: #{quantized_linear.1} parent=5 // pred_check
        %p218 = pneg %p217
      $region14: #{quantized_linear.1} parent=5 // pred_check_branch
        %220 = sbr.rel (%p218) target = $region16
      $region15: #{quantized_linear.1} parent=5 // pred_region
        // Predicated region
        $region17: #{quantized_linear.1} parent=15 // pred_check
          %p221 = pneg %p58
        $region18: #{quantized_linear.1} parent=15 // pred_check_branch
          %223 = sbr.rel (%p221) target = $region20
        $region19: #{quantized_linear.1} parent=15 // pred_region
          %s224 = sand.u32 %s48, 1
          %s225 = scalar_lea.sflag [#allocation4], %s224
          %s226 = sand.u32 %s48, 1
          %s227 = smul.addr %s226, 64
          %s228 = scalar_lea.vmem [#allocation3], %s227
          %s229 = smul.u32 8, %s26
          %231 = vsyncadd %s225, 0
          %s232 = smul.addr %s229, 2
          %s233 = sadd.s32 %s25, %s232
          %s234 = smul.addr %s233, 8
          %s235 = scalar_lea.hbm %s0, %s234
          %s236 = sshll.u32 %s235, 4
          %s237 = int_to_ptr.hbm [resolvable:$true] %s236
          %s238 = sshll.u32 %s228, 4
          %s239 = int_to_ptr.vmem [resolvable:$true] %s238
          %244 = dma.hbm_to_vmem [thread:$0]  %s237, 1024, %s239, %s225, 256, 128, 8
        $region20: #{quantized_linear.1} parent=15 // pred_fallthru
          _
        // Predicated region
        $region21: #{quantized_linear.1} parent=15 // pred_check
          %p245 = pneg %p86
        $region22: #{quantized_linear.1} parent=15 // pred_check_branch
          %247 = sbr.rel (%p245) target = $region24
        $region23: #{quantized_linear.1} parent=15 // pred_region
          %p248 = scmp.lt.s32.totalorder %s26, 1
          %s249 = scalar_select %p248, %s26, 1
          %p250 = scmp.lt.s32.totalorder %s25, 1
          %s251 = scalar_select %p250, %s25, 1
          %s252 = smul.addr %s249, 2
          %s253 = sadd.s32 %s251, %s252
          %s254 = smul.addr %s253, 4
          %s255 = scalar_lea.vmem %s1, %s254
        $region24: #{quantized_linear.1} parent=15 // pred_fallthru
          _
        // Predicated region
        $region25: #{quantized_linear.1} parent=15 // pred_check
          %p256 = pneg %p114
        $region26: #{quantized_linear.1} parent=15 // pred_check_branch
          %258 = sbr.rel (%p256) target = $region28
        $region27: #{quantized_linear.1} parent=15 // pred_region
          %p259 = scmp.lt.s32.totalorder %s26, 1
          %s260 = scalar_select %p259, %s26, 1
          %p261 = scmp.lt.s32.totalorder %s25, 1
          %s262 = scalar_select %p261, %s25, 1
          %s263 = smul.addr %s260, 2
          %s264 = sadd.s32 %s262, %s263
          %s265 = smul.addr %s264, 4
          %s266 = scalar_lea.vmem %s2, %s265
        $region28: #{quantized_linear.1} parent=15 // pred_fallthru
          _
        // Predicated region
        $region29: #{quantized_linear.1} parent=15 // pred_check
          %p267 = pneg %p140
        $region30: #{quantized_linear.1} parent=15 // pred_check_branch
          %269 = sbr.rel (%p267) target = $region32
        $region31: #{quantized_linear.1} parent=15 // pred_region
          %p270 = scmp.lt.s32.totalorder %s25, 1
          %s271 = scalar_select %p270, %s25, 1
          %s272 = scalar_lea.vmem %s3, %s271
        $region32: #{quantized_linear.1} parent=15 // pred_fallthru
          _
        // Predicated region
        $region33: #{quantized_linear.1} parent=15 // pred_check
          %p273 = pneg %p168
        $region34: #{quantized_linear.1} parent=15 // pred_check_branch
          %275 = sbr.rel (%p273) target = $region36
        $region35: #{quantized_linear.1} parent=15 // pred_region
          %s276 = sand.u32 %s158, 1
          %s277 = sand.u32 %s158, 1
          %s278 = smul.addr %s277, 32
          %s279 = scalar_lea.vmem [#allocation6], %s278
          %s280 = smul.u32 2, %s24
          %s281 = smul.u32 4, %s26
          %s282 = smul.addr %s280, 8
          %s283 = sadd.s32 %s281, %s282
          %s284 = smul.addr %s283, 4
          %s285 = scalar_lea.vmem %s4, %s284
          // Predicated region
          $region37: #{quantized_linear.1} parent=35 // pred_check
            _
          $region38: #{quantized_linear.1} parent=35 // pred_check_branch
            %287 = sbr.rel (0) target = $region40
          $region39: #{quantized_linear.1} parent=35 // pred_region
            // Predicated region
            $region41: #{quantized_linear.1} parent=39 // pred_check
              _
            $region42: #{quantized_linear.1} parent=39 // pred_check_branch
              %289 = sbr.rel (0) target = $region44
            $region43: #{quantized_linear.1} parent=39 // pred_region
              loop: start=0, step=1, limit=1
              $region45: #{quantized_linear.1} parent=43 // loop_pre_header
                _
              $region46: #{quantized_linear.1} parent=43 // loop_header
                %s291 = sphi 0, %s295
                %p292 = scmp.ge.s32.totalorder %s291, 1
                %s296 = sphi %s285, %s285
                %s297 = sphi %s279, %s279
              $region47: #{quantized_linear.1} parent=43 // loop_header_branch
                %294 = sbr.rel (%p292) target = $region51
              $region48: #{quantized_linear.1} parent=43 // loop_body
                %v298 = vld [vmem:[%s296] sm:$0xff]
                %299 = vst [vmem:[%s297] sm:$0xff] %v298
                %v300 = vld [vmem:[%s296 + $0x8] sm:$0xff]
                %301 = vst [vmem:[%s297 + $0x8] sm:$0xff] %v300
                %v302 = vld [vmem:[%s296 + $0x20] sm:$0xff]
                %303 = vst [vmem:[%s297 + $0x10] sm:$0xff] %v302
                %v304 = vld [vmem:[%s296 + $0x28] sm:$0xff]
                %305 = vst [vmem:[%s297 + $0x18] sm:$0xff] %v304
              $region49: #{quantized_linear.1} parent=43 // loop_footer
                %s295 = sadd.s32 1, %s291
              $region50: #{quantized_linear.1} parent=43 // loop_footer_branch
                %290 = sbr.rel target = $region46
              $region51: #{quantized_linear.1} parent=43 // loop_exit
                _
            $region44: #{quantized_linear.1} parent=39 // pred_fallthru
              _
            // Predicated region
            $region52: #{quantized_linear.1} parent=39 // pred_check
              _
            $region53: #{quantized_linear.1} parent=39 // pred_check_branch
              %307 = sbr.rel target = $region55
            $region54: #{quantized_linear.1} parent=39 // pred_region
              _
            $region55: #{quantized_linear.1} parent=39 // pred_fallthru
              _
          $region40: #{quantized_linear.1} parent=35 // pred_fallthru
            _
          %308 = vnop
        $region36: #{quantized_linear.1} parent=15 // pred_fallthru
          _
      $region16: #{quantized_linear.1} parent=5 // pred_fallthru
        _
      %p309 = scmp.le.s32.totalorder 1, %s17
      %p310 = scmp.lt.s32.totalorder %s17, 5
      %p311 = pnand %p309, %p310
      %p312 = pneg %p311
      // Predicated region
      $region56: #{quantized_linear.1} parent=5 // pred_check
        _
      $region57: #{quantized_linear.1} parent=5 // pred_check_branch
        %314 = sbr.rel (%p311) target = $region59
      $region58: #{quantized_linear.1} parent=5 // pred_region
        %s315 = ssub.s32 %s17, 1
        %s316 = sand.u32 %s51, 1
        %s317 = scalar_lea.sflag [#allocation4], %s316
        %s318 = sand.u32 %s51, 1
        %s319 = smul.addr %s318, 64
        %s320 = scalar_lea.vmem [#allocation3], %s319
        // Predicated region
        $region60: #{quantized_linear.1} parent=58 // pred_check
          %p321 = pneg %p64
        $region61: #{quantized_linear.1} parent=58 // pred_check_branch
          %323 = sbr.rel (%p321) target = $region63
        $region62: #{quantized_linear.1} parent=58 // pred_region
          %325 = dma.done %s317, 1024
        $region63: #{quantized_linear.1} parent=58 // pred_fallthru
          _
        %s326 = sand.u32 %s161, 1
        %s327 = sand.u32 %s161, 1
        %s328 = smul.addr %s327, 32
        %s329 = scalar_lea.vmem [#allocation6], %s328
        // Predicated region
        $region64: #{quantized_linear.1} parent=58 // pred_check
          %p330 = pneg %p174
        $region65: #{quantized_linear.1} parent=58 // pred_check_branch
          %332 = sbr.rel (%p330) target = $region67
        $region66: #{quantized_linear.1} parent=58 // pred_region
          _
        $region67: #{quantized_linear.1} parent=58 // pred_fallthru
          _
        %s333 = sand.u32 %s51, 1
        %s334 = scalar_lea.sflag [#allocation4], %s333
        %s335 = sand.u32 %s51, 1
        %s336 = smul.addr %s335, 64
        %s337 = scalar_lea.vmem [#allocation3], %s336
        %p338 = pneg %p64
        %p339 = pneg %p61
        %p340 = scmp.lt.s32.totalorder %s29, 1
        %s341 = scalar_select %p340, %s29, 1
        %p342 = scmp.lt.s32.totalorder %s28, 1
        %s343 = scalar_select %p342, %s28, 1
        %s344 = smul.addr %s341, 2
        %s345 = sadd.s32 %s343, %s344
        %s346 = smul.addr %s345, 4
        %s347 = scalar_lea.vmem %s1, %s346
        %p348 = pneg %p92
        %p349 = pneg %p89
        %p350 = scmp.lt.s32.totalorder %s29, 1
        %s351 = scalar_select %p350, %s29, 1
        %p352 = scmp.lt.s32.totalorder %s28, 1
        %s353 = scalar_select %p352, %s28, 1
        %s354 = smul.addr %s351, 2
        %s355 = sadd.s32 %s353, %s354
        %s356 = smul.addr %s355, 4
        %s357 = scalar_lea.vmem %s2, %s356
        %p358 = pneg %p120
        %p359 = pneg %p117
        %p360 = scmp.lt.s32.totalorder %s28, 1
        %s361 = scalar_select %p360, %s28, 1
        %s362 = scalar_lea.vmem %s3, %s361
        %p363 = pneg %p146
        %p364 = pneg %p143
        %s365 = sand.u32 %s161, 1
        %s366 = sand.u32 %s161, 1
        %s367 = smul.addr %s366, 32
        %s368 = scalar_lea.vmem [#allocation6], %s367
        %p369 = pneg %p174
        %p370 = pneg %p171
        %p371 = pneg %p202
        %p372 = pneg %p199
        %s373 = sand.u32 %s189, 1
        %s374 = scalar_lea.sflag [#allocation5], %s373
        %s375 = sand.u32 %s189, 1
        %s376 = smul.addr %s375, 16
        %s377 = scalar_lea.vmem [#allocation7], %s376
        %s378 = smul.u32 8, %s29
        %p379 = scmp.lt.s32.totalorder %s29, 1
        %s380 = scalar_select %p379, %s29, 1
        %p381 = scmp.lt.s32.totalorder %s28, 1
        %s382 = scalar_select %p381, %s28, 1
        %s383 = smul.addr %s380, 2
        %s384 = sadd.s32 %s382, %s383
        %s385 = smul.addr %s384, 4
        %s386 = scalar_lea.vmem %s1, %s385
        %p387 = scmp.lt.s32.totalorder %s29, 1
        %s388 = scalar_select %p387, %s29, 1
        %p389 = scmp.lt.s32.totalorder %s28, 1
        %s390 = scalar_select %p389, %s28, 1
        %s391 = smul.addr %s388, 2
        %s392 = sadd.s32 %s390, %s391
        %s393 = smul.addr %s392, 4
        %s394 = scalar_lea.vmem %s2, %s393
        %p395 = scmp.lt.s32.totalorder %s28, 1
        %s396 = scalar_select %p395, %s28, 1
        %s397 = scalar_lea.vmem %s3, %s396
        %s398 = smul.u32 2, %s27
        %s399 = smul.u32 4, %s29
        %s400 = smul.u32 2, %s27
        %p402 = scmp.eq.s32.totalorder %s29, 0
        // Predicated region
        $region68: #{quantized_linear.1} parent=58 // pred_check
          %p403 = pneg %p402
        $region69: #{quantized_linear.1} parent=58 // pred_check_branch
          %405 = sbr.rel (%p403) target = $region71
        $region70: #{quantized_linear.1} parent=58 // pred_region
          %406 = vst [vmem:[#allocation2] sm:$0xff] 0.0
          %407 = vst [vmem:[#allocation2 + $0x8] sm:$0xff] 0.0
        $region71: #{quantized_linear.1} parent=58 // pred_fallthru
          _
        %v408 = vld [vmem:[%s386] sm:$0xf]
        %v409 = vld [vmem:[%s394] sm:$0xf]
        %v410 = vld [vmem:[%s329] sm:$0xff]
        %v411 = vld [vmem:[%s329 + $0x8] sm:$0xff]
        %v412 = vld [vmem:[%s329 + $0x10] sm:$0xff]
        %v413 = vld [vmem:[%s329 + $0x18] sm:$0xff]
        %v414 = vld [vmem:[%s320] sm:$0xff]
        %v415 = vld [vmem:[%s320 + $0x8] sm:$0xff]
        %v416 = vunpack.c.0.s8 %v414
        %v417 = vunpack.c.1.s8 %v414
        %v418 = vunpack.c.2.s8 %v414
        %v419 = vunpack.c.3.s8 %v414
        %v420 = vunpack.c.0.s8 %v415
        %v421 = vunpack.c.1.s8 %v415
        %v422 = vunpack.c.2.s8 %v415
        %v423 = vunpack.c.3.s8 %v415
        %v424 = vand.u32 %v416, 255
        %v425 = vand.u32 %v417, 255
        %v426 = vand.u32 %v418, 255
        %v427 = vand.u32 %v419, 255
        %v428 = vand.u32 %v420, 255
        %v429 = vand.u32 %v421, 255
        %v430 = vand.u32 %v422, 255
        %v431 = vand.u32 %v423, 255
        %v432 = vand.u32 %v424, 15
        %v433 = vand.u32 %v425, 15
        %v434 = vand.u32 %v426, 15
        %v435 = vand.u32 %v427, 15
        %v436 = vand.u32 %v428, 15
        %v437 = vand.u32 %v429, 15
        %v438 = vand.u32 %v430, 15
        %v439 = vand.u32 %v431, 15
        %v440 = vcvt.s32.f32 %v432
        %v441 = vcvt.s32.f32 %v433
        %v442 = vcvt.s32.f32 %v434
        %v443 = vcvt.s32.f32 %v435
        %v444 = vcvt.s32.f32 %v436
        %v445 = vcvt.s32.f32 %v437
        %v446 = vcvt.s32.f32 %v438
        %v447 = vcvt.s32.f32 %v439
        %v448 = vpack.c.bf16 %v441, %v440
        %v449 = vpack.c.bf16 %v443, %v442
        %v450 = vpack.c.bf16 %v445, %v444
        %v451 = vpack.c.bf16 %v447, %v446
        %v452 = vshra.s32 %v424, 4
        %v453 = vshra.s32 %v425, 4
        %v454 = vshra.s32 %v426, 4
        %v455 = vshra.s32 %v427, 4
        %v456 = vshra.s32 %v428, 4
        %v457 = vshra.s32 %v429, 4
        %v458 = vshra.s32 %v430, 4
        %v459 = vshra.s32 %v431, 4
        %v460 = vcvt.s32.f32 %v452
        %v461 = vcvt.s32.f32 %v453
        %v462 = vcvt.s32.f32 %v454
        %v463 = vcvt.s32.f32 %v455
        %v464 = vcvt.s32.f32 %v456
        %v465 = vcvt.s32.f32 %v457
        %v466 = vcvt.s32.f32 %v458
        %v467 = vcvt.s32.f32 %v459
        %v468 = vpack.c.bf16 %v461, %v460
        %v469 = vpack.c.bf16 %v463, %v462
        %v470 = vpack.c.bf16 %v465, %v464
        %v471 = vpack.c.bf16 %v467, %v466
        %v474 = vunpack.c.l.b16 %v410
        %v475 = vunpack.c.l.b16 %v412
        %v476 = vpack.c.b16 %v475, %v474
        %477 = vrot.lane.b32.xlu0 %v476, 64
        %v478 = vpop.permute.xlu0 %477
        %vm479 = vcmask 523264
        %v481 = vsel %vm479, %v478, 0
        %483 = vmatpush.bf16.msra.mxu0 0
        %484 = vmatpush.bf16.msra.mxu0 0
        %485 = vmatpush.bf16.msra.mxu0 0
        %486 = vmatpush.bf16.msra.mxu0 0
        %487 = vmatpush.bf16.msra.mxu0 %v471
        %488 = vmatpush.bf16.msra.mxu0 %v470
        %489 = vmatpush.bf16.msra.mxu0 %v469
        %490 = vmatpush.bf16.msra.mxu0 %v468
        %491 = vmatmul.bf16.gmra.mxu0 %v481
        %v492 = vpop.f32.mrf.mxu0
        %v493 = vadd.f32 0.0, %v492
        %v494 = vpop.f32.mrf.mxu0
        %v495 = vadd.f32 0.0, %v494
        %496 = vdwg.mxu0
        %v498 = vsel %vm479, %v476, 0
        %500 = vmatpush.bf16.msra.mxu0 0
        %501 = vmatpush.bf16.msra.mxu0 0
        %502 = vmatpush.bf16.msra.mxu0 0
        %503 = vmatpush.bf16.msra.mxu0 0
        %504 = vmatpush.bf16.msra.mxu0 %v451
        %505 = vmatpush.bf16.msra.mxu0 %v450
        %506 = vmatpush.bf16.msra.mxu0 %v449
        %507 = vmatpush.bf16.msra.mxu0 %v448
        %508 = vmatmul.bf16.gmra.mxu0 %v498
        %v509 = vpop.f32.mrf.mxu0
        %v510 = vadd.f32 %v493, %v509
        %v511 = vpop.f32.mrf.mxu0
        %v512 = vadd.f32 %v495, %v511
        %513 = vdwg.mxu0
        %v514 = vunpack.c.l.bf16 %v410
        %v515 = vunpack.c.l.bf16 %v412
        %516 = vadd.xlane.f32.xlu0 %v514
        %v517 = vpop.xlane.xlu0 %516
        %518 = vadd.xlane.f32.xlu0 %v515
        %v519 = vpop.xlane.xlu0 %518
        %v520 = vld [vmem:[#allocation2] sm:$0xff]
        %v521 = vld [vmem:[#allocation2 + $0x8] sm:$0xff]
        %v522 = vperm.slane %v408, 0
        %v523 = vmul.f32 %v510, %v522
        %v524 = vmul.f32 %v512, %v522
        %v525 = vperm.slane %v409, 0
        %v526 = vmul.f32 %v517, %v525
        %v527 = vmul.f32 %v519, %v525
        %v528 = vsub.f32 %v523, %v526
        %v529 = vsub.f32 %v524, %v527
        %v530 = vadd.f32 %v520, %v528
        %v531 = vadd.f32 %v521, %v529
        %532 = vst [vmem:[#allocation2] sm:$0xff] %v530
        %533 = vst [vmem:[#allocation2 + $0x8] sm:$0xff] %v531
        %v534 = vld [vmem:[%s320 + $0x10] sm:$0xff]
        %v535 = vld [vmem:[%s320 + $0x18] sm:$0xff]
        %v536 = vunpack.c.0.s8 %v534
        %v537 = vunpack.c.1.s8 %v534
        %v538 = vunpack.c.2.s8 %v534
        %v539 = vunpack.c.3.s8 %v534
        %v540 = vunpack.c.0.s8 %v535
        %v541 = vunpack.c.1.s8 %v535
        %v542 = vunpack.c.2.s8 %v535
        %v543 = vunpack.c.3.s8 %v535
        %v544 = vand.u32 %v536, 255
        %v545 = vand.u32 %v537, 255
        %v546 = vand.u32 %v538, 255
        %v547 = vand.u32 %v539, 255
        %v548 = vand.u32 %v540, 255
        %v549 = vand.u32 %v541, 255
        %v550 = vand.u32 %v542, 255
        %v551 = vand.u32 %v543, 255
        %v552 = vand.u32 %v544, 15
        %v553 = vand.u32 %v545, 15
        %v554 = vand.u32 %v546, 15
        %v555 = vand.u32 %v547, 15
        %v556 = vand.u32 %v548, 15
        %v557 = vand.u32 %v549, 15
        %v558 = vand.u32 %v550, 15
        %v559 = vand.u32 %v551, 15
        %v560 = vcvt.s32.f32 %v552
        %v561 = vcvt.s32.f32 %v553
        %v562 = vcvt.s32.f32 %v554
        %v563 = vcvt.s32.f32 %v555
        %v564 = vcvt.s32.f32 %v556
        %v565 = vcvt.s32.f32 %v557
        %v566 = vcvt.s32.f32 %v558
        %v567 = vcvt.s32.f32 %v559
        %v568 = vpack.c.bf16 %v561, %v560
        %v569 = vpack.c.bf16 %v563, %v562
        %v570 = vpack.c.bf16 %v565, %v564
        %v571 = vpack.c.bf16 %v567, %v566
        %v572 = vshra.s32 %v544, 4
        %v573 = vshra.s32 %v545, 4
        %v574 = vshra.s32 %v546, 4
        %v575 = vshra.s32 %v547, 4
        %v576 = vshra.s32 %v548, 4
        %v577 = vshra.s32 %v549, 4
        %v578 = vshra.s32 %v550, 4
        %v579 = vshra.s32 %v551, 4
        %v580 = vcvt.s32.f32 %v572
        %v581 = vcvt.s32.f32 %v573
        %v582 = vcvt.s32.f32 %v574
        %v583 = vcvt.s32.f32 %v575
        %v584 = vcvt.s32.f32 %v576
        %v585 = vcvt.s32.f32 %v577
        %v586 = vcvt.s32.f32 %v578
        %v587 = vcvt.s32.f32 %v579
        %v588 = vpack.c.bf16 %v581, %v580
        %v589 = vpack.c.bf16 %v583, %v582
        %v590 = vpack.c.bf16 %v585, %v584
        %v591 = vpack.c.bf16 %v587, %v586
        %v592 = vunpack.c.h.b16 %v410
        %v593 = vunpack.c.h.b16 %v412
        %v594 = vpack.c.b16 %v593, %v592
        %595 = vrot.lane.b32.xlu0 %v594, 64
        %v596 = vpop.permute.xlu0 %595
        %v598 = vsel %vm479, %v596, 0
        %600 = vmatpush.bf16.msra.mxu0 0
        %601 = vmatpush.bf16.msra.mxu0 0
        %602 = vmatpush.bf16.msra.mxu0 0
        %603 = vmatpush.bf16.msra.mxu0 0
        %604 = vmatpush.bf16.msra.mxu0 %v591
        %605 = vmatpush.bf16.msra.mxu0 %v590
        %606 = vmatpush.bf16.msra.mxu0 %v589
        %607 = vmatpush.bf16.msra.mxu0 %v588
        %608 = vmatmul.bf16.gmra.mxu0 %v598
        %v609 = vpop.f32.mrf.mxu0
        %v610 = vadd.f32 0.0, %v609
        %v611 = vpop.f32.mrf.mxu0
        %v612 = vadd.f32 0.0, %v611
        %613 = vdwg.mxu0
        %v615 = vsel %vm479, %v594, 0
        %617 = vmatpush.bf16.msra.mxu0 0
        %618 = vmatpush.bf16.msra.mxu0 0
        %619 = vmatpush.bf16.msra.mxu0 0
        %620 = vmatpush.bf16.msra.mxu0 0
        %621 = vmatpush.bf16.msra.mxu0 %v571
        %622 = vmatpush.bf16.msra.mxu0 %v570
        %623 = vmatpush.bf16.msra.mxu0 %v569
        %624 = vmatpush.bf16.msra.mxu0 %v568
        %625 = vmatmul.bf16.gmra.mxu0 %v615
        %v626 = vpop.f32.mrf.mxu0
        %v627 = vadd.f32 %v610, %v626
        %v628 = vpop.f32.mrf.mxu0
        %v629 = vadd.f32 %v612, %v628
        %630 = vdwg.mxu0
        %v631 = vrot.slane %v410, 4
        %v632 = vrot.slane %v412, 4
        %v635 = vunpack.c.l.bf16 %v631
        %v636 = vunpack.c.l.bf16 %v632
        %637 = vadd.xlane.f32.xlu0 %v635
        %v638 = vpop.xlane.xlu0 %637
        %639 = vadd.xlane.f32.xlu0 %v636
        %v640 = vpop.xlane.xlu0 %639
        %v641 = vld [vmem:[#allocation2] sm:$0xff]
        %v642 = vld [vmem:[#allocation2 + $0x8] sm:$0xff]
        %v643 = vperm.slane %v408, 1
        %v644 = vmul.f32 %v627, %v643
        %v645 = vmul.f32 %v629, %v643
        %v646 = vperm.slane %v409, 1
        %v647 = vmul.f32 %v638, %v646
        %v648 = vmul.f32 %v640, %v646
        %v649 = vsub.f32 %v644, %v647
        %v650 = vsub.f32 %v645, %v648
        %v651 = vadd.f32 %v641, %v649
        %v652 = vadd.f32 %v642, %v650
        %653 = vst [vmem:[#allocation2] sm:$0xff] %v651
        %654 = vst [vmem:[#allocation2 + $0x8] sm:$0xff] %v652
        %v655 = vld [vmem:[%s320 + $0x20] sm:$0xff]
        %v656 = vld [vmem:[%s320 + $0x28] sm:$0xff]
        %v657 = vunpack.c.0.s8 %v655
        %v658 = vunpack.c.1.s8 %v655
        %v659 = vunpack.c.2.s8 %v655
        %v660 = vunpack.c.3.s8 %v655
        %v661 = vunpack.c.0.s8 %v656
        %v662 = vunpack.c.1.s8 %v656
        %v663 = vunpack.c.2.s8 %v656
        %v664 = vunpack.c.3.s8 %v656
        %v665 = vand.u32 %v657, 255
        %v666 = vand.u32 %v658, 255
        %v667 = vand.u32 %v659, 255
        %v668 = vand.u32 %v660, 255
        %v669 = vand.u32 %v661, 255
        %v670 = vand.u32 %v662, 255
        %v671 = vand.u32 %v663, 255
        %v672 = vand.u32 %v664, 255
        %v673 = vand.u32 %v665, 15
        %v674 = vand.u32 %v666, 15
        %v675 = vand.u32 %v667, 15
        %v676 = vand.u32 %v668, 15
        %v677 = vand.u32 %v669, 15
        %v678 = vand.u32 %v670, 15
        %v679 = vand.u32 %v671, 15
        %v680 = vand.u32 %v672, 15
        %v681 = vcvt.s32.f32 %v673
        %v682 = vcvt.s32.f32 %v674
        %v683 = vcvt.s32.f32 %v675
        %v684 = vcvt.s32.f32 %v676
        %v685 = vcvt.s32.f32 %v677
        %v686 = vcvt.s32.f32 %v678
        %v687 = vcvt.s32.f32 %v679
        %v688 = vcvt.s32.f32 %v680
        %v689 = vpack.c.bf16 %v682, %v681
        %v690 = vpack.c.bf16 %v684, %v683
        %v691 = vpack.c.bf16 %v686, %v685
        %v692 = vpack.c.bf16 %v688, %v687
        %v693 = vshra.s32 %v665, 4
        %v694 = vshra.s32 %v666, 4
        %v695 = vshra.s32 %v667, 4
        %v696 = vshra.s32 %v668, 4
        %v697 = vshra.s32 %v669, 4
        %v698 = vshra.s32 %v670, 4
        %v699 = vshra.s32 %v671, 4
        %v700 = vshra.s32 %v672, 4
        %v701 = vcvt.s32.f32 %v693
        %v702 = vcvt.s32.f32 %v694
        %v703 = vcvt.s32.f32 %v695
        %v704 = vcvt.s32.f32 %v696
        %v705 = vcvt.s32.f32 %v697
        %v706 = vcvt.s32.f32 %v698
        %v707 = vcvt.s32.f32 %v699
        %v708 = vcvt.s32.f32 %v700
        %v709 = vpack.c.bf16 %v702, %v701
        %v710 = vpack.c.bf16 %v704, %v703
        %v711 = vpack.c.bf16 %v706, %v705
        %v712 = vpack.c.bf16 %v708, %v707
        %v715 = vunpack.c.l.b16 %v411
        %v716 = vunpack.c.l.b16 %v413
        %v717 = vpack.c.b16 %v716, %v715
        %718 = vrot.lane.b32.xlu0 %v717, 64
        %v719 = vpop.permute.xlu0 %718
        %v721 = vsel %vm479, %v719, 0
        %723 = vmatpush.bf16.msra.mxu0 0
        %724 = vmatpush.bf16.msra.mxu0 0
        %725 = vmatpush.bf16.msra.mxu0 0
        %726 = vmatpush.bf16.msra.mxu0 0
        %727 = vmatpush.bf16.msra.mxu0 %v712
        %728 = vmatpush.bf16.msra.mxu0 %v711
        %729 = vmatpush.bf16.msra.mxu0 %v710
        %730 = vmatpush.bf16.msra.mxu0 %v709
        %731 = vmatmul.bf16.gmra.mxu0 %v721
        %v732 = vpop.f32.mrf.mxu0
        %v733 = vadd.f32 0.0, %v732
        %v734 = vpop.f32.mrf.mxu0
        %v735 = vadd.f32 0.0, %v734
        %736 = vdwg.mxu0
        %v738 = vsel %vm479, %v717, 0
        %740 = vmatpush.bf16.msra.mxu0 0
        %741 = vmatpush.bf16.msra.mxu0 0
        %742 = vmatpush.bf16.msra.mxu0 0
        %743 = vmatpush.bf16.msra.mxu0 0
        %744 = vmatpush.bf16.msra.mxu0 %v692
        %745 = vmatpush.bf16.msra.mxu0 %v691
        %746 = vmatpush.bf16.msra.mxu0 %v690
        %747 = vmatpush.bf16.msra.mxu0 %v689
        %748 = vmatmul.bf16.gmra.mxu0 %v738
        %v749 = vpop.f32.mrf.mxu0
        %v750 = vadd.f32 %v733, %v749
        %v751 = vpop.f32.mrf.mxu0
        %v752 = vadd.f32 %v735, %v751
        %753 = vdwg.mxu0
        %v754 = vunpack.c.l.bf16 %v411
        %v755 = vunpack.c.l.bf16 %v413
        %756 = vadd.xlane.f32.xlu0 %v754
        %v757 = vpop.xlane.xlu0 %756
        %758 = vadd.xlane.f32.xlu0 %v755
        %v759 = vpop.xlane.xlu0 %758
        %v760 = vld [vmem:[#allocation2] sm:$0xff]
        %v761 = vld [vmem:[#allocation2 + $0x8] sm:$0xff]
        %v762 = vperm.slane %v408, 2
        %v763 = vmul.f32 %v750, %v762
        %v764 = vmul.f32 %v752, %v762
        %v765 = vperm.slane %v409, 2
        %v766 = vmul.f32 %v757, %v765
        %v767 = vmul.f32 %v759, %v765
        %v768 = vsub.f32 %v763, %v766
        %v769 = vsub.f32 %v764, %v767
        %v770 = vadd.f32 %v760, %v768
        %v771 = vadd.f32 %v761, %v769
        %772 = vst [vmem:[#allocation2] sm:$0xff] %v770
        %773 = vst [vmem:[#allocation2 + $0x8] sm:$0xff] %v771
        %v774 = vld [vmem:[%s320 + $0x30] sm:$0xff]
        %v775 = vld [vmem:[%s320 + $0x38] sm:$0xff]
        %v776 = vunpack.c.0.s8 %v774
        %v777 = vunpack.c.1.s8 %v774
        %v778 = vunpack.c.2.s8 %v774
        %v779 = vunpack.c.3.s8 %v774
        %v780 = vunpack.c.0.s8 %v775
        %v781 = vunpack.c.1.s8 %v775
        %v782 = vunpack.c.2.s8 %v775
        %v783 = vunpack.c.3.s8 %v775
        %v784 = vand.u32 %v776, 255
        %v785 = vand.u32 %v777, 255
        %v786 = vand.u32 %v778, 255
        %v787 = vand.u32 %v779, 255
        %v788 = vand.u32 %v780, 255
        %v789 = vand.u32 %v781, 255
        %v790 = vand.u32 %v782, 255
        %v791 = vand.u32 %v783, 255
        %v792 = vand.u32 %v784, 15
        %v793 = vand.u32 %v785, 15
        %v794 = vand.u32 %v786, 15
        %v795 = vand.u32 %v787, 15
        %v796 = vand.u32 %v788, 15
        %v797 = vand.u32 %v789, 15
        %v798 = vand.u32 %v790, 15
        %v799 = vand.u32 %v791, 15
        %v800 = vcvt.s32.f32 %v792
        %v801 = vcvt.s32.f32 %v793
        %v802 = vcvt.s32.f32 %v794
        %v803 = vcvt.s32.f32 %v795
        %v804 = vcvt.s32.f32 %v796
        %v805 = vcvt.s32.f32 %v797
        %v806 = vcvt.s32.f32 %v798
        %v807 = vcvt.s32.f32 %v799
        %v808 = vpack.c.bf16 %v801, %v800
        %v809 = vpack.c.bf16 %v803, %v802
        %v810 = vpack.c.bf16 %v805, %v804
        %v811 = vpack.c.bf16 %v807, %v806
        %v812 = vshra.s32 %v784, 4
        %v813 = vshra.s32 %v785, 4
        %v814 = vshra.s32 %v786, 4
        %v815 = vshra.s32 %v787, 4
        %v816 = vshra.s32 %v788, 4
        %v817 = vshra.s32 %v789, 4
        %v818 = vshra.s32 %v790, 4
        %v819 = vshra.s32 %v791, 4
        %v820 = vcvt.s32.f32 %v812
        %v821 = vcvt.s32.f32 %v813
        %v822 = vcvt.s32.f32 %v814
        %v823 = vcvt.s32.f32 %v815
        %v824 = vcvt.s32.f32 %v816
        %v825 = vcvt.s32.f32 %v817
        %v826 = vcvt.s32.f32 %v818
        %v827 = vcvt.s32.f32 %v819
        %v828 = vpack.c.bf16 %v821, %v820
        %v829 = vpack.c.bf16 %v823, %v822
        %v830 = vpack.c.bf16 %v825, %v824
        %v831 = vpack.c.bf16 %v827, %v826
        %v832 = vunpack.c.h.b16 %v411
        %v833 = vunpack.c.h.b16 %v413
        %v834 = vpack.c.b16 %v833, %v832
        %835 = vrot.lane.b32.xlu0 %v834, 64
        %v836 = vpop.permute.xlu0 %835
        %v838 = vsel %vm479, %v836, 0
        %840 = vmatpush.bf16.msra.mxu0 0
        %841 = vmatpush.bf16.msra.mxu0 0
        %842 = vmatpush.bf16.msra.mxu0 0
        %843 = vmatpush.bf16.msra.mxu0 0
        %844 = vmatpush.bf16.msra.mxu0 %v831
        %845 = vmatpush.bf16.msra.mxu0 %v830
        %846 = vmatpush.bf16.msra.mxu0 %v829
        %847 = vmatpush.bf16.msra.mxu0 %v828
        %848 = vmatmul.bf16.gmra.mxu0 %v838
        %v849 = vpop.f32.mrf.mxu0
        %v850 = vadd.f32 0.0, %v849
        %v851 = vpop.f32.mrf.mxu0
        %v852 = vadd.f32 0.0, %v851
        %853 = vdwg.mxu0
        %v855 = vsel %vm479, %v834, 0
        %857 = vmatpush.bf16.msra.mxu0 0
        %858 = vmatpush.bf16.msra.mxu0 0
        %859 = vmatpush.bf16.msra.mxu0 0
        %860 = vmatpush.bf16.msra.mxu0 0
        %861 = vmatpush.bf16.msra.mxu0 %v811
        %862 = vmatpush.bf16.msra.mxu0 %v810
        %863 = vmatpush.bf16.msra.mxu0 %v809
        %864 = vmatpush.bf16.msra.mxu0 %v808
        %865 = vmatmul.bf16.gmra.mxu0 %v855
        %v866 = vpop.f32.mrf.mxu0
        %v867 = vadd.f32 %v850, %v866
        %v868 = vpop.f32.mrf.mxu0
        %v869 = vadd.f32 %v852, %v868
        %870 = vdwg.mxu0
        %v871 = vrot.slane %v411, 4
        %v872 = vrot.slane %v413, 4
        %v875 = vunpack.c.l.bf16 %v871
        %v876 = vunpack.c.l.bf16 %v872
        %877 = vadd.xlane.f32.xlu0 %v875
        %v878 = vpop.xlane.xlu0 %877
        %879 = vadd.xlane.f32.xlu0 %v876
        %v880 = vpop.xlane.xlu0 %879
        %v881 = vld [vmem:[#allocation2] sm:$0xff]
        %v882 = vld [vmem:[#allocation2 + $0x8] sm:$0xff]
        %v883 = vperm.slane %v408, 3
        %v884 = vmul.f32 %v867, %v883
        %v885 = vmul.f32 %v869, %v883
        %v886 = vperm.slane %v409, 3
        %v887 = vmul.f32 %v878, %v886
        %v888 = vmul.f32 %v880, %v886
        %v889 = vsub.f32 %v884, %v887
        %v890 = vsub.f32 %v885, %v888
        %v891 = vadd.f32 %v881, %v889
        %v892 = vadd.f32 %v882, %v890
        %893 = vst [vmem:[#allocation2] sm:$0xff] %v891
        %894 = vst [vmem:[#allocation2 + $0x8] sm:$0xff] %v892
        %p895 = scmp.eq.s32.totalorder %s29, 1
        // Predicated region
        $region72: #{quantized_linear.1} parent=58 // pred_check
          %p896 = pneg %p895
        $region73: #{quantized_linear.1} parent=58 // pred_check_branch
          %898 = sbr.rel (%p896) target = $region75
        $region74: #{quantized_linear.1} parent=58 // pred_region
          %v899 = vld [vmem:[#allocation2] sm:$0xff]
          %v900 = vld [vmem:[#allocation2 + $0x8] sm:$0xff]
          %v901 = vld [vmem:[%s397] sm:$0x1]
          %v903 = vperm.slane %v901, 0
          %v905 = vadd.f32 %v899, %v903
          %v906 = vadd.f32 %v900, %v903
          %907 = vst [vmem:[%s377] sm:$0xff] %v905
          %908 = vst [vmem:[%s377 + $0x8] sm:$0xff] %v906
        $region75: #{quantized_linear.1} parent=58 // pred_fallthru
          _
        %s909 = sand.u32 %s189, 1
        %s910 = scalar_lea.sflag [#allocation5], %s909
        %s911 = sand.u32 %s189, 1
        %s912 = smul.addr %s911, 16
        %s913 = scalar_lea.vmem [#allocation7], %s912
        // Predicated region
        $region76: #{quantized_linear.1} parent=58 // pred_check
          %p914 = pneg %p199
        $region77: #{quantized_linear.1} parent=58 // pred_check_branch
          %916 = sbr.rel (%p914) target = $region79
        $region78: #{quantized_linear.1} parent=58 // pred_region
          %s917 = smul.u32 2, %s27
          %919 = vsyncadd %s910, 0
          %s920 = smul.addr %s917, 2
          %s921 = sadd.s32 %s28, %s920
          %s922 = smul.addr %s921, 8
          %s923 = scalar_lea.hbm %s5, %s922
          %s924 = sshll.u32 %s913, 4
          %s925 = int_to_ptr.vmem [resolvable:$true] %s924
          %s926 = sshll.u32 %s923, 4
          %s927 = int_to_ptr.hbm [resolvable:$true] %s926
          %932 = dma.vmem_to_hbm [thread:$0]  %s925, 256, %s927, %s910, 128, 256, 8
        $region79: #{quantized_linear.1} parent=58 // pred_fallthru
          _
      $region59: #{quantized_linear.1} parent=5 // pred_fallthru
        _
      %p933 = scmp.le.s32.totalorder 2, %s17
      // Predicated region
      $region80: #{quantized_linear.1} parent=5 // pred_check
        %p934 = pneg %p933
      $region81: #{quantized_linear.1} parent=5 // pred_check_branch
        %936 = sbr.rel (%p934) target = $region83
      $region82: #{quantized_linear.1} parent=5 // pred_region
        %s937 = ssub.s32 %s17, 2
        // Predicated region
        $region84: #{quantized_linear.1} parent=82 // pred_check
          %p938 = pneg %p205
        $region85: #{quantized_linear.1} parent=82 // pred_check_branch
          %940 = sbr.rel (%p938) target = $region87
        $region86: #{quantized_linear.1} parent=82 // pred_region
          %s941 = sand.u32 %s190, 1
          %s942 = scalar_lea.sflag [#allocation5], %s941
          %s943 = sand.u32 %s190, 1
          %s944 = smul.addr %s943, 16
          %s945 = scalar_lea.vmem [#allocation7], %s944
          %947 = dma.done %s942, 256
        $region87: #{quantized_linear.1} parent=82 // pred_fallthru
          _
      $region83: #{quantized_linear.1} parent=5 // pred_fallthru
        _
    $region6: #{quantized_linear.1} parent=1 // loop_footer
      %s21 = sadd.s32 1, %s17
    $region7: #{quantized_linear.1} parent=1 // loop_footer_branch
      %16 = sbr.rel target = $region3
    $region8: #{quantized_linear.1} parent=1 // loop_exit
      _
    %948 = vsyncpa [#allocation4], 1
    %s949 = scalar_lea.sflag [#allocation4], 1
    %950 = vsyncpa %s949, 1
    %951 = vsyncpa [#allocation5], 1
    %s952 = scalar_lea.sflag [#allocation5], 1
    %953 = vsyncpa %s952, 1

</llo_original>
